<compile_context>
chip_gen: v5e
topology: v5e:2x2
jax: 0.10.0
libtpu: 0.0.40
codegen_flags: <defaults>
</compile_context>

<pallas_src>
import jax
import jax.numpy as jnp
from jax.experimental import pallas as pl
from jax.experimental.pallas import tpu as pltpu


# ----------------------------------------------------------------------------
# Kernel
# ----------------------------------------------------------------------------
def mlp_kernel(x_ref, w1_ref, b1_ref, w2_ref, b2_ref, w3_ref, b3_ref, out_ref):
    x = x_ref[...]                                             # (BT, ni)

    # Fused layer 1: columns 0:64 -> actor hidden, 64:128 -> critic hidden.
    h1 = jnp.tanh(
        jnp.dot(x, w1_ref[...], preferred_element_type=jnp.float32)
        + b1_ref[...])                                         # (BT, 128)

    # Fused layer 2 (block-diagonal weights keep the two branches independent).
    h2 = jnp.tanh(
        jnp.dot(h1, w2_ref[...], preferred_element_type=jnp.float32)
        + b2_ref[...])                                         # (BT, 128)

    # Critic head: VPU multiply + lane reduction (w3 is zero on the actor half),
    # instead of a 1-lane MXU matmul.
    critic = jnp.sum(h2 * w3_ref[...], axis=-1, keepdims=True) + b3_ref[...]

    # Lane-dense output slab: cols 0:64 = actor, cols 64:128 = critic broadcast.
    lane = jax.lax.broadcasted_iota(jnp.int32, h2.shape, 1)
    out_ref[...] = jnp.where(lane < 64, h2, critic).astype(out_ref.dtype)


# ----------------------------------------------------------------------------
# Parameter init (mimics PyTorch init_layer) and one-time fusion
# ----------------------------------------------------------------------------
def init_linear_params(key, out_features, in_features):
    """weight ~ N(0,1), each row L2-normalized; bias = 0."""
    w = jax.random.normal(key, (out_features, in_features), dtype=jnp.float32)
    w = w / jnp.sqrt(jnp.sum(w * w, axis=1, keepdims=True))
    b = jnp.zeros((out_features,), dtype=jnp.float32)
    return w, b


def make_mlp_params(key, num_inputs):
    keys = jax.random.split(key, 5)
    w1a, b1a = init_linear_params(keys[0], 64, num_inputs)
    w2a, b2a = init_linear_params(keys[1], 64, 64)
    w1c, b1c = init_linear_params(keys[2], 64, num_inputs)
    w2c, b2c = init_linear_params(keys[3], 64, 64)
    w3c, b3c = init_linear_params(keys[4], 1, 64)
    return dict(w1a=w1a, b1a=b1a, w2a=w2a, b2a=b2a,
                w1c=w1c, b1c=b1c, w2c=w2c, b2c=b2c, w3c=w3c, b3c=b3c)


def fuse_mlp_params(params):
    """One-time layout plumbing: transpose + fuse so the hot path has no HLOs."""
    w1 = jnp.concatenate([params["w1a"].T, params["w1c"].T], axis=1)   # (ni, 128)
    b1 = jnp.concatenate([params["b1a"], params["b1c"]])[None, :]      # (1, 128)

    w2 = jnp.zeros((128, 128), dtype=jnp.float32)                      # block-diag
    w2 = w2.at[:64, :64].set(params["w2a"].T)
    w2 = w2.at[64:, 64:].set(params["w2c"].T)
    b2 = jnp.concatenate([params["b2a"], params["b2c"]])[None, :]      # (1, 128)

    # Critic head row, zero-padded across the actor half of the 128 lanes.
    w3 = jnp.concatenate(
        [jnp.zeros((1, 64), dtype=jnp.float32), params["w3c"]], axis=1)  # (1, 128)
    b3 = params["b3c"].reshape(1, 1)                                     # (1, 1)
    return dict(w1=w1, b1=b1, w2=w2, b2=b2, w3=w3, b3=b3)


# ----------------------------------------------------------------------------
# Wrapper
# ----------------------------------------------------------------------------
def mlp_forward(x, fused, bt_max=512):
    B, ni = x.shape

    # Pad batch to sublane multiple, pick batch tile, pad to tile multiple.
    Bp = ((B + 7) // 8) * 8
    BT = min(bt_max, Bp)
    Bp = ((Bp + BT - 1) // BT) * BT
    if Bp != B:
        x = jnp.pad(x, ((0, Bp - B), (0, 0)))

    grid = (Bp // BT,)
    const = lambda i: (0, 0)       # weights stay VMEM-resident across tiles

    flops = 2 * Bp * (ni * 128 + 128 * 128 + 128)
    transcendentals = Bp * 256
    bytes_accessed = 4 * (Bp * ni + Bp * 128
                          + ni * 128 + 128 * 128 + 3 * 128 + 1)

    slab = pl.pallas_call(
        mlp_kernel,
        out_shape=jax.ShapeDtypeStruct((Bp, 128), jnp.float32),
        grid=grid,
        in_specs=[
            pl.BlockSpec((BT, ni), lambda i: (i, 0)),   # x tile (pipelined)
            pl.BlockSpec((ni, 128), const),             # w1 fused
            pl.BlockSpec((1, 128), const),              # b1 fused
            pl.BlockSpec((128, 128), const),            # w2 block-diagonal
            pl.BlockSpec((1, 128), const),              # b2 fused
            pl.BlockSpec((1, 128), const),              # w3 padded row
            pl.BlockSpec((1, 1), const),                # b3
        ],
        out_specs=pl.BlockSpec((BT, 128), lambda i: (i, 0)),
        compiler_params=pltpu.CompilerParams(
            dimension_semantics=("parallel",),
            vmem_limit_bytes=32 * 1024 * 1024,          # safe on v7x (64 MiB phys)
        ),
        cost_estimate=pl.CostEstimate(
            flops=flops,
            transcendentals=transcendentals,
            bytes_accessed=bytes_accessed,
        ),
    )(x, fused["w1"], fused["b1"], fused["w2"], fused["b2"],
      fused["w3"], fused["b3"])

    actor = slab[:B, :64]
    critic = slab[:B, 64:65]
    return actor, critic


# ----------------------------------------------------------------------------
# Pure-JAX reference (mirrors the PyTorch module exactly)
# ----------------------------------------------------------------------------
def mlp_forward_ref(x, params):
    h = jnp.tanh(x @ params["w1a"].T + params["b1a"])
    actor = jnp.tanh(h @ params["w2a"].T + params["b2a"])
    c = jnp.tanh(x @ params["w1c"].T + params["b1c"])
    c = jnp.tanh(c @ params["w2c"].T + params["b2c"])
    critic = c @ params["w3c"].T + params["b3c"]
    return actor, critic


if __name__ == "__main__":
    key = jax.random.PRNGKey(0)
    k_param, k_x = jax.random.split(key)

    batch, num_inputs = 8, 32
    params = make_mlp_params(k_param, num_inputs)
    fused = fuse_mlp_params(params)            # one-time, off the hot path
    x = jax.random.normal(k_x, (batch, num_inputs), dtype=jnp.float32)

    actor, critic = mlp_forward(x, fused)
    jax.block_until_ready((actor, critic))

    actor_ref, critic_ref = mlp_forward_ref(x, params)
    assert actor.shape == (batch, 64) and critic.shape == (batch, 1)
    assert jnp.allclose(actor, actor_ref, atol=1e-5, rtol=1e-5)
    assert jnp.allclose(critic, critic_ref, atol=1e-5, rtol=1e-5)

    print("KERNEL_OK")
</pallas_src>

<mosaic_0001>
module attributes {stable_mosaic.version = 11 : i64} {
  func.func @mlp_kernel(%arg0: i32, %arg1: memref<8x32xf32, #tpu.memory_space<vmem>>, %arg2: memref<32x128xf32, #tpu.memory_space<vmem>>, %arg3: memref<1x128xf32, #tpu.memory_space<vmem>>, %arg4: memref<128x128xf32, #tpu.memory_space<vmem>>, %arg5: memref<1x128xf32, #tpu.memory_space<vmem>>, %arg6: memref<1x128xf32, #tpu.memory_space<vmem>>, %arg7: memref<1x1xf32, #tpu.memory_space<vmem>>, %arg8: memref<8x128xf32, #tpu.memory_space<vmem>>) attributes {dimension_semantics = [#tpu.dimension_semantics<parallel>], iteration_bounds = array<i64: 1>, scalar_prefetch = 0 : i64, scratch_operands = 0 : i64, tpu.core_type = #tpu.core_type<tc>, window_params = [{transform_indices = @transform_0, window_bounds = array<i64: 8, 32>}, {pipeline_mode = #tpu.pipeline_mode<synchronous>, transform_indices = @transform_1, window_bounds = array<i64: 32, 128>}, {pipeline_mode = #tpu.pipeline_mode<synchronous>, transform_indices = @transform_2, window_bounds = array<i64: 1, 128>}, {pipeline_mode = #tpu.pipeline_mode<synchronous>, transform_indices = @transform_3, window_bounds = array<i64: 128, 128>}, {pipeline_mode = #tpu.pipeline_mode<synchronous>, transform_indices = @transform_4, window_bounds = array<i64: 1, 128>}, {pipeline_mode = #tpu.pipeline_mode<synchronous>, transform_indices = @transform_5, window_bounds = array<i64: 1, 128>}, {pipeline_mode = #tpu.pipeline_mode<synchronous>, transform_indices = @transform_6, window_bounds = array<i64: 1, 1>}, {transform_indices = @transform_7, window_bounds = array<i64: 8, 128>}]} {
    %c0 = arith.constant 0 : index
    %c0_0 = arith.constant 0 : index
    %0 = vector.load %arg1[%c0, %c0_0] : memref<8x32xf32, #tpu.memory_space<vmem>>, vector<8x32xf32>
    %c0_1 = arith.constant 0 : index
    %c0_2 = arith.constant 0 : index
    %1 = vector.load %arg2[%c0_1, %c0_2] : memref<32x128xf32, #tpu.memory_space<vmem>>, vector<32x128xf32>
    %cst = arith.constant dense<0.000000e+00> : vector<8x128xf32>
    %2 = tpu.matmul %0, %1, %cst {dimension_numbers = #tpu.dot_dimension_numbers<[1], [0], [0], [1], [0, 0, 1, 1], [], []>} : vector<8x32xf32>, vector<32x128xf32>, vector<8x128xf32> -> vector<8x128xf32>
    %c0_3 = arith.constant 0 : index
    %c0_4 = arith.constant 0 : index
    %3 = vector.load %arg3[%c0_3, %c0_4] : memref<1x128xf32, #tpu.memory_space<vmem>>, vector<1x128xf32>
    %4 = vector.broadcast %3 : vector<1x128xf32> to vector<8x128xf32>
    %5 = arith.addf %2, %4 : vector<8x128xf32>
    %6 = math.tanh %5 : vector<8x128xf32>
    %c0_5 = arith.constant 0 : index
    %c0_6 = arith.constant 0 : index
    %7 = vector.load %arg4[%c0_5, %c0_6] : memref<128x128xf32, #tpu.memory_space<vmem>>, vector<128x128xf32>
    %cst_7 = arith.constant dense<0.000000e+00> : vector<8x128xf32>
    %8 = tpu.matmul %6, %7, %cst_7 {dimension_numbers = #tpu.dot_dimension_numbers<[1], [0], [0], [1], [0, 0, 1, 1], [], []>} : vector<8x128xf32>, vector<128x128xf32>, vector<8x128xf32> -> vector<8x128xf32>
    %c0_8 = arith.constant 0 : index
    %c0_9 = arith.constant 0 : index
    %9 = vector.load %arg5[%c0_8, %c0_9] : memref<1x128xf32, #tpu.memory_space<vmem>>, vector<1x128xf32>
    %10 = vector.broadcast %9 : vector<1x128xf32> to vector<8x128xf32>
    %11 = arith.addf %8, %10 : vector<8x128xf32>
    %12 = math.tanh %11 : vector<8x128xf32>
    %c0_10 = arith.constant 0 : index
    %c0_11 = arith.constant 0 : index
    %13 = vector.load %arg6[%c0_10, %c0_11] : memref<1x128xf32, #tpu.memory_space<vmem>>, vector<1x128xf32>
    %14 = vector.broadcast %13 : vector<1x128xf32> to vector<8x128xf32>
    %15 = arith.mulf %12, %14 : vector<8x128xf32>
    %cst_12 = arith.constant dense<0.000000e+00> : vector<8xf32>
    %16 = vector.multi_reduction <add>, %15, %cst_12 [1] : vector<8x128xf32> to vector<8xf32>
    %17 = vector.shape_cast %16 : vector<8xf32> to vector<8x1xf32>
    %c0_13 = arith.constant 0 : index
    %c0_14 = arith.constant 0 : index
    %18 = vector.load %arg7[%c0_13, %c0_14] : memref<1x1xf32, #tpu.memory_space<vmem>>, vector<1x1xf32>
    %19 = vector.broadcast %18 : vector<1x1xf32> to vector<8x1xf32>
    %20 = arith.addf %17, %19 : vector<8x1xf32>
    %21 = tpu.iota {dimensions = array<i32: 1>} : vector<8x128xi32>
    %c64_i32 = arith.constant 64 : i32
    %22 = vector.broadcast %c64_i32 : i32 to vector<8x128xi32>
    %23 = arith.cmpi slt, %21, %22 : vector<8x128xi32>
    %24 = vector.shape_cast %20 : vector<8x1xf32> to vector<8x1xf32>
    %25 = vector.broadcast %24 : vector<8x1xf32> to vector<8x128xf32>
    %26 = arith.select %23, %12, %25 : vector<8x128xi1>, vector<8x128xf32>
    %c0_15 = arith.constant 0 : index
    %c0_16 = arith.constant 0 : index
    %27 = vector.load %arg8[%c0_15, %c0_16] : memref<8x128xf32, #tpu.memory_space<vmem>>, vector<8x128xf32>
    tpu.vector_store %arg8[%c0_15, %c0_16], %26 {strides = array<i32>} : memref<8x128xf32, #tpu.memory_space<vmem>>, vector<8x128xf32>,
    return
  }
  func.func @transform_0(%arg0: i32) -> (i32, i32) {
    %c0_i32 = arith.constant 0 : i32
    %c0_i32_0 = arith.constant 0 : i32
    return %arg0, %c0_i32 : i32, i32
  }
  func.func @transform_1(%arg0: i32) -> (i32, i32) {
    %c0_i32 = arith.constant 0 : i32
    %c0_i32_0 = arith.constant 0 : i32
    %c0_i32_1 = arith.constant 0 : i32
    return %c0_i32, %c0_i32_0 : i32, i32
  }
  func.func @transform_2(%arg0: i32) -> (i32, i32) {
    %c0_i32 = arith.constant 0 : i32
    %c0_i32_0 = arith.constant 0 : i32
    %c0_i32_1 = arith.constant 0 : i32
    return %c0_i32, %c0_i32_0 : i32, i32
  }
  func.func @transform_3(%arg0: i32) -> (i32, i32) {
    %c0_i32 = arith.constant 0 : i32
    %c0_i32_0 = arith.constant 0 : i32
    %c0_i32_1 = arith.constant 0 : i32
    return %c0_i32, %c0_i32_0 : i32, i32
  }
  func.func @transform_4(%arg0: i32) -> (i32, i32) {
    %c0_i32 = arith.constant 0 : i32
    %c0_i32_0 = arith.constant 0 : i32
    %c0_i32_1 = arith.constant 0 : i32
    return %c0_i32, %c0_i32_0 : i32, i32
  }
  func.func @transform_5(%arg0: i32) -> (i32, i32) {
    %c0_i32 = arith.constant 0 : i32
    %c0_i32_0 = arith.constant 0 : i32
    %c0_i32_1 = arith.constant 0 : i32
    return %c0_i32, %c0_i32_0 : i32, i32
  }
  func.func @transform_6(%arg0: i32) -> (i32, i32) {
    %c0_i32 = arith.constant 0 : i32
    %c0_i32_0 = arith.constant 0 : i32
    %c0_i32_1 = arith.constant 0 : i32
    return %c0_i32, %c0_i32_0 : i32, i32
  }
  func.func @transform_7(%arg0: i32) -> (i32, i32) {
    %c0_i32 = arith.constant 0 : i32
    %c0_i32_0 = arith.constant 0 : i32
    return %arg0, %c0_i32 : i32, i32
  }
}

</mosaic_0001>

<llo_original>
// kernel: tpu_custom_call.1
$region0: #{tpu_custom_call.1}
  #allocation0 [shape = 'u32[]', space=smem, size = 0x4, offset = 0x4, fixed_abs, tag = 'smem constant byte address 0x4 - core index']
  #allocation1 [shape = 'u32[72,128]{1,0:T(1,128)}', space=vmem, size = 0x9000, scoped, tag = 'internal scratch']
  #allocation2 [shape = 'f32[1,1]{1,0:T(1,128)S(1)}', space=vmem, size = 0x200, scoped, tag = 'scoped memory for tpu_custom_call.1']
  %s0 = inlined_call_operand.hbm [shape: f32[8,32], index: 0, kind: input, shape index: {}]
  %s1 = inlined_call_operand.hbm [shape: f32[32,128], index: 1, kind: input, shape index: {}]
  %s2 = inlined_call_operand.vmem [shape: f32[1,128], index: 2, kind: input, shape index: {}]
  %s3 = inlined_call_operand.hbm [shape: f32[128,128], index: 3, kind: input, shape index: {}]
  %s4 = inlined_call_operand.vmem [shape: f32[1,128], index: 4, kind: input, shape index: {}]
  %s5 = inlined_call_operand.vmem [shape: f32[1,128], index: 5, kind: input, shape index: {}]
  %s6 = inlined_call_operand.<no memory space> [shape: f32[1,1], index: 6, kind: input, shape index: {}]
  %s7 = inlined_call_operand.hbm [shape: f32[8,128], index: 7, kind: output, shape index: {}]
  %s8 = sld [smem:[#allocation0]]
  $region50: #{tpu_custom_call.1} parent=0
    _
  %s10 = ssub.s32 1, %s8
  %s11 = scalar_select 0, %s10, %s8
  %v12 = vstv %s6
  %13 = vst [vmem:[#allocation2] sm:$0x1] %v12
  $region1: #{tpu_custom_call.1} parent=0
    #allocation3 [shape = 'u8[4096]{0}', space=vmem, size = 0x1000, scoped, tag = 'input window, operand 0, single buffered']
    #allocation4 [shape = 's32[1]{0}', space=sflag, size = 0x4, scoped, tag = 'scoped memory for tpu_custom_call.1']
    #allocation5 [shape = 's32[1]{0}', space=sflag, size = 0x4, scoped, tag = 'scoped memory for tpu_custom_call.1']
    #allocation6 [shape = 'u8[16384]{0}', space=vmem, size = 0x4000, scoped, tag = 'input window, operand 1, single buffered']
    #allocation7 [shape = 's32[1]{0}', space=sflag, size = 0x4, scoped, tag = 'scoped memory for tpu_custom_call.1']
    #allocation8 [shape = 'u8[65536]{0}', space=vmem, size = 0x10000, scoped, tag = 'input window, operand 3, single buffered']
    #allocation9 [shape = 'u8[4096]{0}', space=vmem, size = 0x1000, scoped, tag = 'output window, operand 0, single buffered']
    %14 = vsyncpa [#allocation4], 0
    %15 = vsyncpa [#allocation7], 0
    %16 = vsyncpa [#allocation5], 0
    // Predicated region
    $region2: #{tpu_custom_call.1} parent=1 // pred_check
      _
    $region3: #{tpu_custom_call.1} parent=1 // pred_check_branch
      %18 = sbr.rel (0) target = $region5
    $region4: #{tpu_custom_call.1} parent=1 // pred_region
      %20 = vsyncadd [#allocation4], 0
      %s22 = sshll.u32 %s0, 4
      %s23 = int_to_ptr.hbm [resolvable:$true] %s22
      %s24 = sshll.u32 [#allocation3], 4
      %s25 = int_to_ptr.vmem [resolvable:$true] %s24
      %27 = dma.hbm_to_vmem [thread:$0]  %s23, 128, %s25, [#allocation4]
    $region5: #{tpu_custom_call.1} parent=1 // pred_fallthru
      _
    // Predicated region
    $region6: #{tpu_custom_call.1} parent=1 // pred_check
      _
    $region7: #{tpu_custom_call.1} parent=1 // pred_check_branch
      %29 = sbr.rel (0) target = $region9
    $region8: #{tpu_custom_call.1} parent=1 // pred_region
      %31 = vsyncadd [#allocation7], 0
      %s32 = sshll.u32 %s1, 4
      %s33 = int_to_ptr.hbm [resolvable:$true] %s32
      %s34 = sshll.u32 [#allocation6], 4
      %s35 = int_to_ptr.vmem [resolvable:$true] %s34
      %40 = dma.hbm_to_vmem [thread:$0]  %s33, 512, %s35, [#allocation7], 128, 128, 8
    $region9: #{tpu_custom_call.1} parent=1 // pred_fallthru
      _
    // Predicated region
    $region10: #{tpu_custom_call.1} parent=1 // pred_check
      _
    $region11: #{tpu_custom_call.1} parent=1 // pred_check_branch
      %42 = sbr.rel (0) target = $region13
    $region12: #{tpu_custom_call.1} parent=1 // pred_region
      _
    $region13: #{tpu_custom_call.1} parent=1 // pred_fallthru
      _
    // Predicated region
    $region14: #{tpu_custom_call.1} parent=1 // pred_check
      _
    $region15: #{tpu_custom_call.1} parent=1 // pred_check_branch
      %44 = sbr.rel (0) target = $region17
    $region16: #{tpu_custom_call.1} parent=1 // pred_region
      %46 = vsyncadd [#allocation7], 0
      %s47 = sshll.u32 %s3, 4
      %s48 = int_to_ptr.hbm [resolvable:$true] %s47
      %s49 = sshll.u32 [#allocation8], 4
      %s50 = int_to_ptr.vmem [resolvable:$true] %s49
      %55 = dma.hbm_to_vmem [thread:$0]  %s48, 2048, %s50, [#allocation7], 128, 128, 8
    $region17: #{tpu_custom_call.1} parent=1 // pred_fallthru
      _
    // Predicated region
    $region18: #{tpu_custom_call.1} parent=1 // pred_check
      _
    $region19: #{tpu_custom_call.1} parent=1 // pred_check_branch
      %57 = sbr.rel (0) target = $region21
    $region20: #{tpu_custom_call.1} parent=1 // pred_region
      _
    $region21: #{tpu_custom_call.1} parent=1 // pred_fallthru
      _
    // Predicated region
    $region22: #{tpu_custom_call.1} parent=1 // pred_check
      _
    $region23: #{tpu_custom_call.1} parent=1 // pred_check_branch
      %59 = sbr.rel (0) target = $region25
    $region24: #{tpu_custom_call.1} parent=1 // pred_region
      _
    $region25: #{tpu_custom_call.1} parent=1 // pred_fallthru
      _
    // Predicated region
    $region26: #{tpu_custom_call.1} parent=1 // pred_check
      _
    $region27: #{tpu_custom_call.1} parent=1 // pred_check_branch
      %61 = sbr.rel (0) target = $region29
    $region28: #{tpu_custom_call.1} parent=1 // pred_region
      _
    $region29: #{tpu_custom_call.1} parent=1 // pred_fallthru
      _
    // Predicated region
    $region30: #{tpu_custom_call.1} parent=1 // pred_check
      _
    $region31: #{tpu_custom_call.1} parent=1 // pred_check_branch
      %63 = sbr.rel (0) target = $region33
    $region32: #{tpu_custom_call.1} parent=1 // pred_region
      %65 = dma.done [#allocation4], 128
    $region33: #{tpu_custom_call.1} parent=1 // pred_fallthru
      _
    // Predicated region
    $region34: #{tpu_custom_call.1} parent=1 // pred_check
      _
    $region35: #{tpu_custom_call.1} parent=1 // pred_check_branch
      %67 = sbr.rel (0) target = $region37
    $region36: #{tpu_custom_call.1} parent=1 // pred_region
      %69 = dma.done [#allocation7], 512
    $region37: #{tpu_custom_call.1} parent=1 // pred_fallthru
      _
    // Predicated region
    $region38: #{tpu_custom_call.1} parent=1 // pred_check
      _
    $region39: #{tpu_custom_call.1} parent=1 // pred_check_branch
      %71 = sbr.rel (0) target = $region41
    $region40: #{tpu_custom_call.1} parent=1 // pred_region
      %73 = dma.done [#allocation7], 2048
    $region41: #{tpu_custom_call.1} parent=1 // pred_fallthru
      _
    %v74 = vld [vmem:[#allocation3] sm:$0xff]
    %v75 = vld [vmem:[#allocation6] sm:$0xff]
    %v76 = vld [vmem:[#allocation6 + $0x8] sm:$0xff]
    %v77 = vld [vmem:[#allocation6 + $0x10] sm:$0xff]
    %v78 = vld [vmem:[#allocation6 + $0x18] sm:$0xff]
    %v79 = vld [vmem:[%s2] sm:$0x1]
    %v81 = vperm.slane %v79, 0
    %vm83 = vcmask 261120
    %v85 = vsel %vm83, %v74, 0
    %87 = vmatpush.msra.mxu0 0.0
    %88 = vmatpush.msra.mxu0 0.0
    %89 = vmatpush.msra.mxu0 0.0
    %90 = vmatpush.msra.mxu0 0.0
    %91 = vmatpush.msra.mxu0 0.0
    %92 = vmatpush.msra.mxu0 0.0
    %93 = vmatpush.msra.mxu0 0.0
    %94 = vmatpush.msra.mxu0 0.0
    %95 = vmatpush.msra.mxu0 0.0
    %96 = vmatpush.msra.mxu0 0.0
    %97 = vmatpush.msra.mxu0 0.0
    %98 = vmatpush.msra.mxu0 0.0
    %99 = vmatpush.msra.mxu0 %v78
    %100 = vmatpush.msra.mxu0 %v77
    %101 = vmatpush.msra.mxu0 %v76
    %102 = vmatpush.msra.mxu0 %v75
    %103 = vmatmul.f32.gmra.mxu0 %v85
    %v104 = vpop.f32.mrf.mxu0
    %v105 = vadd.f32 %v81, %v104
    %106 = vdwg.mxu0
    %v107 = vtanh.pop %v105
    %v108 = vld [vmem:[#allocation8] sm:$0xff]
    %v109 = vld [vmem:[#allocation8 + $0x8] sm:$0xff]
    %v110 = vld [vmem:[#allocation8 + $0x10] sm:$0xff]
    %v111 = vld [vmem:[#allocation8 + $0x18] sm:$0xff]
    %v112 = vld [vmem:[#allocation8 + $0x20] sm:$0xff]
    %v113 = vld [vmem:[#allocation8 + $0x28] sm:$0xff]
    %v114 = vld [vmem:[#allocation8 + $0x30] sm:$0xff]
    %v115 = vld [vmem:[#allocation8 + $0x38] sm:$0xff]
    %v116 = vld [vmem:[#allocation8 + $0x40] sm:$0xff]
    %v117 = vld [vmem:[#allocation8 + $0x48] sm:$0xff]
    %v118 = vld [vmem:[#allocation8 + $0x50] sm:$0xff]
    %v119 = vld [vmem:[#allocation8 + $0x58] sm:$0xff]
    %v120 = vld [vmem:[#allocation8 + $0x60] sm:$0xff]
    %v121 = vld [vmem:[#allocation8 + $0x68] sm:$0xff]
    %v122 = vld [vmem:[#allocation8 + $0x70] sm:$0xff]
    %v123 = vld [vmem:[#allocation8 + $0x78] sm:$0xff]
    %v124 = vld [vmem:[%s4] sm:$0x1]
    %v126 = vperm.slane %v124, 0
    %128 = vmatpush.msra.mxu0 %v123
    %129 = vmatpush.msra.mxu0 %v122
    %130 = vmatpush.msra.mxu0 %v121
    %131 = vmatpush.msra.mxu0 %v120
    %132 = vmatpush.msra.mxu0 %v119
    %133 = vmatpush.msra.mxu0 %v118
    %134 = vmatpush.msra.mxu0 %v117
    %135 = vmatpush.msra.mxu0 %v116
    %136 = vmatpush.msra.mxu0 %v115
    %137 = vmatpush.msra.mxu0 %v114
    %138 = vmatpush.msra.mxu0 %v113
    %139 = vmatpush.msra.mxu0 %v112
    %140 = vmatpush.msra.mxu0 %v111
    %141 = vmatpush.msra.mxu0 %v110
    %142 = vmatpush.msra.mxu0 %v109
    %143 = vmatpush.msra.mxu0 %v108
    %144 = vmatmul.f32.gmra.mxu0 %v107
    %v145 = vpop.f32.mrf.mxu0
    %v146 = vadd.f32 %v126, %v145
    %147 = vdwg.mxu0
    %v148 = vtanh.pop %v146
    %v149 = vld [vmem:[%s5] sm:$0x1]
    %v151 = vperm.slane %v149, 0
    %v153 = vmul.f32 %v148, %v151
    %154 = vadd.xlane.f32.xlu0 %v153
    %v155 = vpop.xlane.xlu0 %154
    %v156 = vld [vmem:[#allocation2] sm:$0x1]
    %v158 = vperm.slane %v156, 0
    %v160 = vadd.f32 %v155, %v158
    %v161 = vlaneseq
    %v162 = vand.u32 %v161, 127
    %vm163 = vcmp.lt.s32.totalorder %v162, 64
    %165 = vset.pattern.permute.xlu0 0
    %166 = vperm.xlu0 %165, %v160
    %v167 = vpop.permute.xlu0 %166
    %v169 = vsel %vm163, %v148, %v167
    %170 = vst [vmem:[#allocation9] sm:$0xff] %v169
    // Predicated region
    $region42: #{tpu_custom_call.1} parent=1 // pred_check
      _
    $region43: #{tpu_custom_call.1} parent=1 // pred_check_branch
      %172 = sbr.rel (0) target = $region45
    $region44: #{tpu_custom_call.1} parent=1 // pred_region
      %174 = vsyncadd [#allocation5], 0
      %s176 = sshll.u32 [#allocation9], 4
      %s177 = int_to_ptr.vmem [resolvable:$true] %s176
      %s178 = sshll.u32 %s7, 4
      %s179 = int_to_ptr.hbm [resolvable:$true] %s178
      %181 = dma.vmem_to_hbm [thread:$0]  %s177, 128, %s179, [#allocation5]
    $region45: #{tpu_custom_call.1} parent=1 // pred_fallthru
      _
    // Predicated region
    $region46: #{tpu_custom_call.1} parent=1 // pred_check
      _
    $region47: #{tpu_custom_call.1} parent=1 // pred_check_branch
      %183 = sbr.rel (0) target = $region49
    $region48: #{tpu_custom_call.1} parent=1 // pred_region
      %185 = dma.done [#allocation5], 128
    $region49: #{tpu_custom_call.1} parent=1 // pred_fallthru
      _
    %186 = vsyncpa [#allocation4], 1
    %187 = vsyncpa [#allocation7], 1
    %188 = vsyncpa [#allocation5], 1

</llo_original>
